<compile_context>
chip_gen: v7x
topology: tpu7x:2x2x1
jax: 0.10.0
libtpu: 0.0.40
codegen_flags: <defaults>
</compile_context>

<pallas_src>
import jax
import jax.numpy as jnp
from jax.experimental import pallas as pl
from jax.experimental.pallas import tpu as pltpu

IN_DIM = 784          # 1*28*28 (true contraction dim, no padding)
HID = 256
OUT_DIM = 10
N_PAD = 128           # lane-dense output width (zero-padded cols, sliced after)


def _round_up(x, m):
    return ((x + m - 1) // m) * m


def _cdiv(a, b):
    return (a + b - 1) // b


def _mlp_kernel(x_ref, w1_ref, b1_ref, w2_ref, b2_ref, o_ref):
    # Cast x to bf16 on the VPU (first matmul rides the MXU in bf16, f32 acc).
    x = x_ref[...].astype(jnp.bfloat16)                          # (TB, 784)
    h = jnp.dot(x, w1_ref[...], preferred_element_type=jnp.float32)
    h = jnp.maximum(h + b1_ref[...], 0.0)                        # (TB, 256) f32
    # Tiny second matmul stays fully f32 for closer parity with the f32 module.
    o = jnp.dot(h, w2_ref[...], preferred_element_type=jnp.float32)  # (TB, 128)
    o_ref[...] = o + b2_ref[...]


def prepare_params(w1, b1, w2, b2):
    """One-time weight prep (equivalent of module init). Not per-call work.

    w1: (784, 256), b1: (256,), w2: (256, 10), b2: (10,)  (x @ W + b layout).
    """
    w1_k = w1.astype(jnp.bfloat16)                               # (784, 256) bf16
    b1_k = b1.reshape(1, HID).astype(jnp.float32)                # (1, 256) f32
    w2_k = jnp.zeros((HID, N_PAD), jnp.float32)
    w2_k = w2_k.at[:, :OUT_DIM].set(w2.astype(jnp.float32))      # (256, 128) f32
    b2_k = jnp.zeros((1, N_PAD), jnp.float32)
    b2_k = b2_k.at[0, :OUT_DIM].set(b2.astype(jnp.float32))      # (1, 128) f32
    return w1_k, b1_k, w2_k, b2_k


def basenet_forward(x, w1_k, b1_k, w2_k, b2_k, *, tb_max=512):
    """x: (B, ...) float32 with prod(...) == 784. Returns (B, 10) float32.

    Weights must already be prepared via prepare_params().
    """
    B = x.shape[0]
    x_flat = x.reshape(B, -1)                                    # x.view(B, -1)
    assert x_flat.shape[1] == IN_DIM, "BaseNet expects 784 flattened features"

    # ---- batch tiling ------------------------------------------------------
    if B <= 256:
        TB = B                       # single full-dim tile; no padding needed
    elif B <= 2 * tb_max:
        TB = _round_up(_cdiv(B, 2), 8)   # >=2 grid steps -> both v7x TCs busy
    else:
        TB = tb_max                  # multiple of 256 (MXU width) and of 8
    grid = (_cdiv(B, TB),)

    out = pl.pallas_call(
        _mlp_kernel,
        out_shape=jax.ShapeDtypeStruct((B, N_PAD), jnp.float32),
        grid=grid,
        in_specs=[
            pl.BlockSpec((TB, IN_DIM), lambda i: (i, 0)),        # x: streamed, f32
            pl.BlockSpec((IN_DIM, HID), lambda i: (0, 0)),       # w1: resident
            pl.BlockSpec((1, HID), lambda i: (0, 0)),            # b1: resident
            pl.BlockSpec((HID, N_PAD), lambda i: (0, 0)),        # w2: resident
            pl.BlockSpec((1, N_PAD), lambda i: (0, 0)),          # b2: resident
        ],
        out_specs=pl.BlockSpec((TB, N_PAD), lambda i: (i, 0)),
        compiler_params=pltpu.CompilerParams(
            dimension_semantics=("parallel",),                   # megacore on v7x
        ),
        cost_estimate=pl.CostEstimate(
            flops=2 * B * (IN_DIM * HID + HID * N_PAD),
            transcendentals=0,
            bytes_accessed=(B * IN_DIM * 4                       # x (f32)
                            + IN_DIM * HID * 2 + HID * 4         # w1/b1
                            + HID * N_PAD * 4 + N_PAD * 4        # w2/b2
                            + B * N_PAD * 4),                    # out
        ),
    )(x_flat, w1_k, b1_k, w2_k, b2_k)

    return out[:B, :OUT_DIM]


def init_params(key):
    """Deterministic init mimicking nn.Linear's default (uniform +/- 1/sqrt(fan_in))."""
    k1, k2, k3, k4 = jax.random.split(key, 4)
    bound1 = 1.0 / jnp.sqrt(784.0)
    bound2 = 1.0 / jnp.sqrt(256.0)
    w1 = jax.random.uniform(k1, (784, 256), jnp.float32, -bound1, bound1)
    b1 = jax.random.uniform(k2, (256,), jnp.float32, -bound1, bound1)
    w2 = jax.random.uniform(k3, (256, 10), jnp.float32, -bound2, bound2)
    b2 = jax.random.uniform(k4, (10,), jnp.float32, -bound2, bound2)
    return w1, b1, w2, b2


if __name__ == "__main__":
    key = jax.random.PRNGKey(0)
    k_x, k_p = jax.random.split(key)

    # Small MNIST-like input consistent with the 784-feature flatten: (B=2, 1, 28, 28).
    x = jax.random.normal(k_x, (2, 1, 28, 28), dtype=jnp.float32)
    w1, b1, w2, b2 = init_params(k_p)

    # One-time prep (as at module construction), then the per-call forward.
    w1_k, b1_k, w2_k, b2_k = prepare_params(w1, b1, w2, b2)
    out = basenet_forward(x, w1_k, b1_k, w2_k, b2_k)
    out = jax.block_until_ready(out)
    assert out.shape == (2, 10)

    # Reference with the same numerics as the kernel (bf16 first matmul, f32 second).
    x_flat = x.reshape(x.shape[0], -1)
    h_ref = jnp.maximum(
        jnp.dot(x_flat.astype(jnp.bfloat16), w1.astype(jnp.bfloat16),
                preferred_element_type=jnp.float32) + b1, 0.0)
    ref_mixed = jnp.dot(h_ref, w2, preferred_element_type=jnp.float32) + b2
    assert jnp.allclose(out, ref_mixed, atol=1e-3, rtol=1e-3)

    # Loose sanity check against the original full-f32 math (PyTorch BaseNet).
    ref_f32 = jnp.maximum(x_flat @ w1 + b1, 0.0) @ w2 + b2
    assert jnp.allclose(out, ref_f32, atol=3e-2, rtol=3e-2)

    print("KERNEL_OK")
</pallas_src>

<mosaic_0001>
module attributes {stable_mosaic.version = 11 : i64} {
  func.func @_mlp_kernel(%arg0: i32, %arg1: memref<2x784xf32, #tpu.memory_space<vmem>>, %arg2: memref<784x256xbf16, #tpu.memory_space<vmem>>, %arg3: memref<1x256xf32, #tpu.memory_space<vmem>>, %arg4: memref<256x128xf32, #tpu.memory_space<vmem>>, %arg5: memref<1x128xf32, #tpu.memory_space<vmem>>, %arg6: memref<2x128xf32, #tpu.memory_space<vmem>>) attributes {dimension_semantics = [#tpu.dimension_semantics<parallel>], iteration_bounds = array<i64: 1>, scalar_prefetch = 0 : i64, scratch_operands = 0 : i64, tpu.core_type = #tpu.core_type<tc>, window_params = [{transform_indices = @transform_0, window_bounds = array<i64: 2, 784>}, {pipeline_mode = #tpu.pipeline_mode<synchronous>, transform_indices = @transform_1, window_bounds = array<i64: 784, 256>}, {pipeline_mode = #tpu.pipeline_mode<synchronous>, transform_indices = @transform_2, window_bounds = array<i64: 1, 256>}, {pipeline_mode = #tpu.pipeline_mode<synchronous>, transform_indices = @transform_3, window_bounds = array<i64: 256, 128>}, {pipeline_mode = #tpu.pipeline_mode<synchronous>, transform_indices = @transform_4, window_bounds = array<i64: 1, 128>}, {transform_indices = @transform_5, window_bounds = array<i64: 2, 128>}]} {
    %c0 = arith.constant 0 : index
    %c0_0 = arith.constant 0 : index
    %0 = vector.load %arg1[%c0, %c0_0] : memref<2x784xf32, #tpu.memory_space<vmem>>, vector<2x784xf32>
    %1 = arith.truncf %0 : vector<2x784xf32> to vector<2x784xbf16>
    %c0_1 = arith.constant 0 : index
    %c0_2 = arith.constant 0 : index
    %2 = vector.load %arg2[%c0_1, %c0_2] : memref<784x256xbf16, #tpu.memory_space<vmem>>, vector<784x256xbf16>
    %cst = arith.constant dense<0.000000e+00> : vector<2x256xf32>
    %3 = tpu.matmul %1, %2, %cst {dimension_numbers = #tpu.dot_dimension_numbers<[1], [0], [0], [1], [0, 0, 1, 1], [], []>} : vector<2x784xbf16>, vector<784x256xbf16>, vector<2x256xf32> -> vector<2x256xf32>
    %c0_3 = arith.constant 0 : index
    %c0_4 = arith.constant 0 : index
    %4 = vector.load %arg3[%c0_3, %c0_4] : memref<1x256xf32, #tpu.memory_space<vmem>>, vector<1x256xf32>
    %5 = vector.broadcast %4 : vector<1x256xf32> to vector<2x256xf32>
    %6 = arith.addf %3, %5 : vector<2x256xf32>
    %cst_5 = arith.constant 0.000000e+00 : f32
    %7 = vector.broadcast %cst_5 : f32 to vector<2x256xf32>
    %8 = arith.maximumf %6, %7 : vector<2x256xf32>
    %c0_6 = arith.constant 0 : index
    %c0_7 = arith.constant 0 : index
    %9 = vector.load %arg4[%c0_6, %c0_7] : memref<256x128xf32, #tpu.memory_space<vmem>>, vector<256x128xf32>
    %cst_8 = arith.constant dense<0.000000e+00> : vector<2x128xf32>
    %10 = tpu.matmul %8, %9, %cst_8 {dimension_numbers = #tpu.dot_dimension_numbers<[1], [0], [0], [1], [0, 0, 1, 1], [], []>} : vector<2x256xf32>, vector<256x128xf32>, vector<2x128xf32> -> vector<2x128xf32>
    %c0_9 = arith.constant 0 : index
    %c0_10 = arith.constant 0 : index
    %11 = vector.load %arg5[%c0_9, %c0_10] : memref<1x128xf32, #tpu.memory_space<vmem>>, vector<1x128xf32>
    %12 = vector.broadcast %11 : vector<1x128xf32> to vector<2x128xf32>
    %13 = arith.addf %10, %12 : vector<2x128xf32>
    %c0_11 = arith.constant 0 : index
    %c0_12 = arith.constant 0 : index
    %14 = vector.load %arg6[%c0_11, %c0_12] : memref<2x128xf32, #tpu.memory_space<vmem>>, vector<2x128xf32>
    tpu.vector_store %arg6[%c0_11, %c0_12], %13 {strides = array<i32>} : memref<2x128xf32, #tpu.memory_space<vmem>>, vector<2x128xf32>,
    return
  }
  func.func @transform_0(%arg0: i32) -> (i32, i32) {
    %c0_i32 = arith.constant 0 : i32
    %c0_i32_0 = arith.constant 0 : i32
    return %arg0, %c0_i32 : i32, i32
  }
  func.func @transform_1(%arg0: i32) -> (i32, i32) {
    %c0_i32 = arith.constant 0 : i32
    %c0_i32_0 = arith.constant 0 : i32
    %c0_i32_1 = arith.constant 0 : i32
    return %c0_i32, %c0_i32_0 : i32, i32
  }
  func.func @transform_2(%arg0: i32) -> (i32, i32) {
    %c0_i32 = arith.constant 0 : i32
    %c0_i32_0 = arith.constant 0 : i32
    %c0_i32_1 = arith.constant 0 : i32
    return %c0_i32, %c0_i32_0 : i32, i32
  }
  func.func @transform_3(%arg0: i32) -> (i32, i32) {
    %c0_i32 = arith.constant 0 : i32
    %c0_i32_0 = arith.constant 0 : i32
    %c0_i32_1 = arith.constant 0 : i32
    return %c0_i32, %c0_i32_0 : i32, i32
  }
  func.func @transform_4(%arg0: i32) -> (i32, i32) {
    %c0_i32 = arith.constant 0 : i32
    %c0_i32_0 = arith.constant 0 : i32
    %c0_i32_1 = arith.constant 0 : i32
    return %c0_i32, %c0_i32_0 : i32, i32
  }
  func.func @transform_5(%arg0: i32) -> (i32, i32) {
    %c0_i32 = arith.constant 0 : i32
    %c0_i32_0 = arith.constant 0 : i32
    return %arg0, %c0_i32 : i32, i32
  }
}

</mosaic_0001>

<llo_original>
// kernel: tpu_custom_call.1
$region0: #{tpu_custom_call.1}
  #allocation0 [shape = 'u32[]', space=smem, size = 0x4, offset = 0x4, fixed_abs, tag = 'smem constant byte address 0x4 - core index']
  #allocation1 [shape = 'u32[144,128]{1,0:T(1,128)}', space=vmem, size = 0x12000, scoped, tag = 'internal scratch']
  %s0 = inlined_call_operand.hbm [shape: f32[2,784], index: 0, kind: input, shape index: {}]
  %s1 = inlined_call_operand.hbm [shape: bf16[784,256], index: 1, kind: input, shape index: {}]
  %s2 = inlined_call_operand.vmem [shape: f32[1,256], index: 2, kind: input, shape index: {}]
  %s3 = inlined_call_operand.hbm [shape: f32[256,128], index: 3, kind: input, shape index: {}]
  %s4 = inlined_call_operand.vmem [shape: f32[1,128], index: 4, kind: input, shape index: {}]
  %s5 = inlined_call_operand.hbm [shape: f32[2,128], index: 5, kind: output, shape index: {}]
  %s6 = sld [smem:[#allocation0]]
  $region42: #{tpu_custom_call.1} parent=0
    _
  %s8 = ssub.s32 1, %s6
  %s9 = scalar_select 0, %s8, %s6
  $region1: #{tpu_custom_call.1} parent=0
    #allocation2 [shape = 'u8[7168]{0}', space=vmem, size = 0x1c00, scoped, tag = 'input window, operand 0, single buffered']
    #allocation3 [shape = 's32[1]{0}', space=sflag, size = 0x4, scoped, tag = 'scoped memory for tpu_custom_call.1']
    #allocation4 [shape = 's32[1]{0}', space=sflag, size = 0x4, scoped, tag = 'scoped memory for tpu_custom_call.1']
    #allocation5 [shape = 'u8[401408]{0}', space=vmem, size = 0x62000, scoped, tag = 'input window, operand 1, single buffered']
    #allocation6 [shape = 's32[1]{0}', space=sflag, size = 0x4, scoped, tag = 'scoped memory for tpu_custom_call.1']
    #allocation7 [shape = 'u8[131072]{0}', space=vmem, size = 0x20000, scoped, tag = 'input window, operand 3, single buffered']
    #allocation8 [shape = 'u8[1024]{0}', space=vmem, size = 0x400, scoped, tag = 'output window, operand 0, single buffered']
    %10 = vsyncpa [#allocation3], 0
    %11 = vsyncpa [#allocation6], 0
    %12 = vsyncpa [#allocation4], 0
    // Predicated region
    $region2: #{tpu_custom_call.1} parent=1 // pred_check
      _
    $region3: #{tpu_custom_call.1} parent=1 // pred_check_branch
      %14 = sbr.rel (0) target = $region5
    $region4: #{tpu_custom_call.1} parent=1 // pred_region
      %s16 = ssub.s32 224, 224
      %17 = vsyncadd [#allocation3], %s16
      %s19 = sshll.u32 [#allocation2], 4
      %s20 = int_to_ptr.vmem [resolvable:$true] %s19
      %22 = dma.hbm_to_vmem [thread:$0]  %s0, 224, %s20, [#allocation3]
    $region5: #{tpu_custom_call.1} parent=1 // pred_fallthru
      _
    // Predicated region
    $region6: #{tpu_custom_call.1} parent=1 // pred_check
      _
    $region7: #{tpu_custom_call.1} parent=1 // pred_check_branch
      %24 = sbr.rel (0) target = $region9
    $region8: #{tpu_custom_call.1} parent=1 // pred_region
      %s26 = ssub.s32 12544, 12544
      %27 = vsyncadd [#allocation6], %s26
      %s28 = sshll.u32 [#allocation5], 4
      %s29 = int_to_ptr.vmem [resolvable:$true] %s28
      %34 = dma.hbm_to_vmem [thread:$0]  %s1, 12544, %s29, [#allocation6], 128, 128, 8
    $region9: #{tpu_custom_call.1} parent=1 // pred_fallthru
      _
    // Predicated region
    $region10: #{tpu_custom_call.1} parent=1 // pred_check
      _
    $region11: #{tpu_custom_call.1} parent=1 // pred_check_branch
      %36 = sbr.rel (0) target = $region13
    $region12: #{tpu_custom_call.1} parent=1 // pred_region
      _
    $region13: #{tpu_custom_call.1} parent=1 // pred_fallthru
      _
    // Predicated region
    $region14: #{tpu_custom_call.1} parent=1 // pred_check
      _
    $region15: #{tpu_custom_call.1} parent=1 // pred_check_branch
      %38 = sbr.rel (0) target = $region17
    $region16: #{tpu_custom_call.1} parent=1 // pred_region
      %s40 = ssub.s32 4096, 4096
      %41 = vsyncadd [#allocation6], %s40
      %s42 = sshll.u32 [#allocation7], 4
      %s43 = int_to_ptr.vmem [resolvable:$true] %s42
      %48 = dma.hbm_to_vmem [thread:$0]  %s3, 4096, %s43, [#allocation6], 128, 128, 8
    $region17: #{tpu_custom_call.1} parent=1 // pred_fallthru
      _
    // Predicated region
    $region18: #{tpu_custom_call.1} parent=1 // pred_check
      _
    $region19: #{tpu_custom_call.1} parent=1 // pred_check_branch
      %50 = sbr.rel (0) target = $region21
    $region20: #{tpu_custom_call.1} parent=1 // pred_region
      _
    $region21: #{tpu_custom_call.1} parent=1 // pred_fallthru
      _
    // Predicated region
    $region22: #{tpu_custom_call.1} parent=1 // pred_check
      _
    $region23: #{tpu_custom_call.1} parent=1 // pred_check_branch
      %52 = sbr.rel (0) target = $region25
    $region24: #{tpu_custom_call.1} parent=1 // pred_region
      %53 = dma.done [#allocation3], 224
    $region25: #{tpu_custom_call.1} parent=1 // pred_fallthru
      _
    // Predicated region
    $region26: #{tpu_custom_call.1} parent=1 // pred_check
      _
    $region27: #{tpu_custom_call.1} parent=1 // pred_check_branch
      %55 = sbr.rel (0) target = $region29
    $region28: #{tpu_custom_call.1} parent=1 // pred_region
      %56 = dma.done [#allocation6], 12544
    $region29: #{tpu_custom_call.1} parent=1 // pred_fallthru
      _
    // Predicated region
    $region30: #{tpu_custom_call.1} parent=1 // pred_check
      _
    $region31: #{tpu_custom_call.1} parent=1 // pred_check_branch
      %58 = sbr.rel (0) target = $region33
    $region32: #{tpu_custom_call.1} parent=1 // pred_region
      %59 = dma.done [#allocation6], 4096
    $region33: #{tpu_custom_call.1} parent=1 // pred_fallthru
      _
    %v61 = vld [vmem:[#allocation2] sm:$0xff]
    %v62 = vld [vmem:[#allocation2 + $0x8] sm:$0x3f]
    %v65 = vcombine.high %v61, %v61
    %v67 = vunpack.c.l.s4 1983009808
    %v68 = vunpack.c.0.s8 %v67
    %v69 = vlaneseq
    %v70 = vshrl.u32 %v69, 7
    %v71 = vsub.s32 %v68, %v70
    %v72 = vrot.slane %v61, %v71
    %v74 = vunpack.c.l.s4 1983009808
    %v75 = vunpack.c.0.s8 %v74
    %v76 = vlaneseq
    %v77 = vshrl.u32 %v76, 7
    %v78 = vsub.s32 %v75, %v77
    %v79 = vrot.slane %v65, %v78
    %v80 = vcombine.high %v72, %v72
    %v81 = vcombine.high %v79, %v79
    %v82 = vcombine.high %v62, %v62
    %v84 = vunpack.c.l.s4 1983009808
    %v85 = vunpack.c.0.s8 %v84
    %v86 = vlaneseq
    %v87 = vshrl.u32 %v86, 7
    %v88 = vsub.s32 %v85, %v87
    %v89 = vrot.slane %v62, %v88
    %v91 = vunpack.c.l.s4 1983009808
    %v92 = vunpack.c.0.s8 %v91
    %v93 = vlaneseq
    %v94 = vshrl.u32 %v93, 7
    %v95 = vsub.s32 %v92, %v94
    %v96 = vrot.slane %v82, %v95
    %v97 = vcombine.high %v89, %v89
    %v105 = vpack.c.bf16 %v72, %v72
    %v106 = vpack.c.bf16 %v80, %v80
    %v107 = vpack.c.bf16 %v79, %v79
    %v108 = vpack.c.bf16 %v81, %v81
    %v109 = vpack.c.bf16 %v89, %v89
    %v110 = vpack.c.bf16 %v97, %v97
    %v111 = vpack.c.bf16 %v96, %v96
    %v112 = vld [vmem:[#allocation5] sm:$0xff]
    %v113 = vld [vmem:[#allocation5 + $0x8] sm:$0xff]
    %v114 = vld [vmem:[#allocation5 + $0x10] sm:$0xff]
    %v115 = vld [vmem:[#allocation5 + $0x18] sm:$0xff]
    %v116 = vld [vmem:[#allocation5 + $0x20] sm:$0xff]
    %v117 = vld [vmem:[#allocation5 + $0x28] sm:$0xff]
    %v118 = vld [vmem:[#allocation5 + $0x30] sm:$0xff]
    %v119 = vld [vmem:[#allocation5 + $0x38] sm:$0xff]
    %v120 = vld [vmem:[#allocation5 + $0x40] sm:$0xff]
    %v121 = vld [vmem:[#allocation5 + $0x48] sm:$0xff]
    %v122 = vld [vmem:[#allocation5 + $0x50] sm:$0xff]
    %v123 = vld [vmem:[#allocation5 + $0x58] sm:$0xff]
    %v124 = vld [vmem:[#allocation5 + $0x60] sm:$0xff]
    %v125 = vld [vmem:[#allocation5 + $0x68] sm:$0xff]
    %v126 = vld [vmem:[#allocation5 + $0x70] sm:$0xff]
    %v127 = vld [vmem:[#allocation5 + $0x78] sm:$0xff]
    %v128 = vld [vmem:[#allocation5 + $0x80] sm:$0xff]
    %v129 = vld [vmem:[#allocation5 + $0x88] sm:$0xff]
    %v130 = vld [vmem:[#allocation5 + $0x90] sm:$0xff]
    %v131 = vld [vmem:[#allocation5 + $0x98] sm:$0xff]
    %v132 = vld [vmem:[#allocation5 + $0xa0] sm:$0xff]
    %v133 = vld [vmem:[#allocation5 + $0xa8] sm:$0xff]
    %v134 = vld [vmem:[#allocation5 + $0xb0] sm:$0xff]
    %v135 = vld [vmem:[#allocation5 + $0xb8] sm:$0xff]
    %v136 = vld [vmem:[#allocation5 + $0xc0] sm:$0xff]
    %v137 = vld [vmem:[#allocation5 + $0xc8] sm:$0xff]
    %v138 = vld [vmem:[#allocation5 + $0xd0] sm:$0xff]
    %v139 = vld [vmem:[#allocation5 + $0xd8] sm:$0xff]
    %v140 = vld [vmem:[#allocation5 + $0xe0] sm:$0xff]
    %v141 = vld [vmem:[#allocation5 + $0xe8] sm:$0xff]
    %v142 = vld [vmem:[#allocation5 + $0xf0] sm:$0xff]
    %v143 = vld [vmem:[#allocation5 + $0xf8] sm:$0xff]
    %v144 = vld [vmem:[#allocation5 + $0x100] sm:$0xff]
    %v145 = vld [vmem:[#allocation5 + $0x108] sm:$0xff]
    %v146 = vld [vmem:[#allocation5 + $0x110] sm:$0xff]
    %v147 = vld [vmem:[#allocation5 + $0x118] sm:$0xff]
    %v148 = vld [vmem:[#allocation5 + $0x120] sm:$0xff]
    %v149 = vld [vmem:[#allocation5 + $0x128] sm:$0xff]
    %v150 = vld [vmem:[#allocation5 + $0x130] sm:$0xff]
    %v151 = vld [vmem:[#allocation5 + $0x138] sm:$0xff]
    %v152 = vld [vmem:[#allocation5 + $0x140] sm:$0xff]
    %v153 = vld [vmem:[#allocation5 + $0x148] sm:$0xff]
    %v154 = vld [vmem:[#allocation5 + $0x150] sm:$0xff]
    %v155 = vld [vmem:[#allocation5 + $0x158] sm:$0xff]
    %v156 = vld [vmem:[#allocation5 + $0x160] sm:$0xff]
    %v157 = vld [vmem:[#allocation5 + $0x168] sm:$0xff]
    %v158 = vld [vmem:[#allocation5 + $0x170] sm:$0xff]
    %v159 = vld [vmem:[#allocation5 + $0x178] sm:$0xff]
    %v160 = vld [vmem:[#allocation5 + $0x180] sm:$0xff]
    %v161 = vld [vmem:[#allocation5 + $0x188] sm:$0xff]
    %v162 = vld [vmem:[#allocation5 + $0x190] sm:$0xff]
    %v163 = vld [vmem:[#allocation5 + $0x198] sm:$0xff]
    %v164 = vld [vmem:[#allocation5 + $0x1a0] sm:$0xff]
    %v165 = vld [vmem:[#allocation5 + $0x1a8] sm:$0xff]
    %v166 = vld [vmem:[#allocation5 + $0x1b0] sm:$0xff]
    %v167 = vld [vmem:[#allocation5 + $0x1b8] sm:$0xff]
    %v168 = vld [vmem:[#allocation5 + $0x1c0] sm:$0xff]
    %v169 = vld [vmem:[#allocation5 + $0x1c8] sm:$0xff]
    %v170 = vld [vmem:[#allocation5 + $0x1d0] sm:$0xff]
    %v171 = vld [vmem:[#allocation5 + $0x1d8] sm:$0xff]
    %v172 = vld [vmem:[#allocation5 + $0x1e0] sm:$0xff]
    %v173 = vld [vmem:[#allocation5 + $0x1e8] sm:$0xff]
    %v174 = vld [vmem:[#allocation5 + $0x1f0] sm:$0xff]
    %v175 = vld [vmem:[#allocation5 + $0x1f8] sm:$0xff]
    %v176 = vld [vmem:[#allocation5 + $0x200] sm:$0xff]
    %v177 = vld [vmem:[#allocation5 + $0x208] sm:$0xff]
    %v178 = vld [vmem:[#allocation5 + $0x210] sm:$0xff]
    %v179 = vld [vmem:[#allocation5 + $0x218] sm:$0xff]
    %v180 = vld [vmem:[#allocation5 + $0x220] sm:$0xff]
    %v181 = vld [vmem:[#allocation5 + $0x228] sm:$0xff]
    %v182 = vld [vmem:[#allocation5 + $0x230] sm:$0xff]
    %v183 = vld [vmem:[#allocation5 + $0x238] sm:$0xff]
    %v184 = vld [vmem:[#allocation5 + $0x240] sm:$0xff]
    %v185 = vld [vmem:[#allocation5 + $0x248] sm:$0xff]
    %v186 = vld [vmem:[#allocation5 + $0x250] sm:$0xff]
    %v187 = vld [vmem:[#allocation5 + $0x258] sm:$0xff]
    %v188 = vld [vmem:[#allocation5 + $0x260] sm:$0xff]
    %v189 = vld [vmem:[#allocation5 + $0x268] sm:$0xff]
    %v190 = vld [vmem:[#allocation5 + $0x270] sm:$0xff]
    %v191 = vld [vmem:[#allocation5 + $0x278] sm:$0xff]
    %v192 = vld [vmem:[#allocation5 + $0x280] sm:$0xff]
    %v193 = vld [vmem:[#allocation5 + $0x288] sm:$0xff]
    %v194 = vld [vmem:[#allocation5 + $0x290] sm:$0xff]
    %v195 = vld [vmem:[#allocation5 + $0x298] sm:$0xff]
    %v196 = vld [vmem:[#allocation5 + $0x2a0] sm:$0xff]
    %v197 = vld [vmem:[#allocation5 + $0x2a8] sm:$0xff]
    %v198 = vld [vmem:[#allocation5 + $0x2b0] sm:$0xff]
    %v199 = vld [vmem:[#allocation5 + $0x2b8] sm:$0xff]
    %v200 = vld [vmem:[#allocation5 + $0x2c0] sm:$0xff]
    %v201 = vld [vmem:[#allocation5 + $0x2c8] sm:$0xff]
    %v202 = vld [vmem:[#allocation5 + $0x2d0] sm:$0xff]
    %v203 = vld [vmem:[#allocation5 + $0x2d8] sm:$0xff]
    %v204 = vld [vmem:[#allocation5 + $0x2e0] sm:$0xff]
    %v205 = vld [vmem:[#allocation5 + $0x2e8] sm:$0xff]
    %v206 = vld [vmem:[#allocation5 + $0x2f0] sm:$0xff]
    %v207 = vld [vmem:[#allocation5 + $0x2f8] sm:$0xff]
    %v208 = vld [vmem:[#allocation5 + $0x300] sm:$0xff]
    %v209 = vld [vmem:[#allocation5 + $0x308] sm:$0xff]
    %v210 = vld [vmem:[%s2] sm:$0x3]
    %v212 = vlaneseq
    %v213 = vshrl.u32 %v212, 7
    %v214 = vsub.s32 0, %v213
    %v215 = vrot.slane %v210, %v214
    %v216 = vlaneseq
    %v217 = vshrl.u32 %v216, 7
    %v218 = vsub.s32 1, %v217
    %v219 = vrot.slane %v210, %v218
    %v320 = vunpack.c.l.b16 %v112
    %v321 = vunpack.c.h.b16 %v112
    %v322 = vunpack.c.l.b16 %v113
    %v323 = vunpack.c.h.b16 %v113
    %v324 = vunpack.c.l.b16 %v114
    %v325 = vunpack.c.h.b16 %v114
    %v326 = vunpack.c.l.b16 %v115
    %v327 = vunpack.c.h.b16 %v115
    %v328 = vunpack.c.l.b16 %v116
    %v329 = vunpack.c.h.b16 %v116
    %v330 = vunpack.c.l.b16 %v117
    %v331 = vunpack.c.h.b16 %v117
    %v332 = vunpack.c.l.b16 %v118
    %v333 = vunpack.c.h.b16 %v118
    %v334 = vunpack.c.l.b16 %v119
    %v335 = vunpack.c.h.b16 %v119
    %v336 = vunpack.c.l.b16 %v120
    %v337 = vunpack.c.h.b16 %v120
    %v338 = vunpack.c.l.b16 %v121
    %v339 = vunpack.c.h.b16 %v121
    %v340 = vunpack.c.l.b16 %v122
    %v341 = vunpack.c.h.b16 %v122
    %v342 = vunpack.c.l.b16 %v123
    %v343 = vunpack.c.h.b16 %v123
    %v344 = vunpack.c.l.b16 %v124
    %v345 = vunpack.c.h.b16 %v124
    %v346 = vunpack.c.l.b16 %v125
    %v347 = vunpack.c.h.b16 %v125
    %v348 = vunpack.c.l.b16 %v126
    %v349 = vunpack.c.h.b16 %v126
    %v350 = vunpack.c.l.b16 %v127
    %v351 = vunpack.c.h.b16 %v127
    %v352 = vunpack.c.l.b16 %v128
    %v353 = vunpack.c.h.b16 %v128
    %v354 = vunpack.c.l.b16 %v129
    %v355 = vunpack.c.h.b16 %v129
    %v356 = vunpack.c.l.b16 %v130
    %v357 = vunpack.c.h.b16 %v130
    %v358 = vunpack.c.l.b16 %v131
    %v359 = vunpack.c.h.b16 %v131
    %v360 = vunpack.c.l.b16 %v132
    %v361 = vunpack.c.h.b16 %v132
    %v362 = vunpack.c.l.b16 %v133
    %v363 = vunpack.c.h.b16 %v133
    %v364 = vunpack.c.l.b16 %v134
    %v365 = vunpack.c.h.b16 %v134
    %v366 = vunpack.c.l.b16 %v135
    %v367 = vunpack.c.h.b16 %v135
    %v368 = vunpack.c.l.b16 %v136
    %v369 = vunpack.c.h.b16 %v136
    %v370 = vunpack.c.l.b16 %v137
    %v371 = vunpack.c.h.b16 %v137
    %v372 = vunpack.c.l.b16 %v138
    %v373 = vunpack.c.h.b16 %v138
    %v374 = vunpack.c.l.b16 %v139
    %v375 = vunpack.c.h.b16 %v139
    %v376 = vunpack.c.l.b16 %v140
    %v377 = vunpack.c.h.b16 %v140
    %v378 = vunpack.c.l.b16 %v141
    %v379 = vunpack.c.h.b16 %v141
    %v380 = vunpack.c.l.b16 %v142
    %v381 = vunpack.c.h.b16 %v142
    %v382 = vunpack.c.l.b16 %v143
    %v383 = vunpack.c.h.b16 %v143
    %v384 = vunpack.c.l.b16 %v144
    %v385 = vunpack.c.h.b16 %v144
    %v386 = vunpack.c.l.b16 %v145
    %v387 = vunpack.c.h.b16 %v145
    %v388 = vunpack.c.l.b16 %v146
    %v389 = vunpack.c.h.b16 %v146
    %v390 = vunpack.c.l.b16 %v147
    %v391 = vunpack.c.h.b16 %v147
    %v392 = vunpack.c.l.b16 %v148
    %v393 = vunpack.c.h.b16 %v148
    %v394 = vunpack.c.l.b16 %v149
    %v395 = vunpack.c.h.b16 %v149
    %v396 = vunpack.c.l.b16 %v150
    %v397 = vunpack.c.h.b16 %v150
    %v398 = vunpack.c.l.b16 %v151
    %v399 = vunpack.c.h.b16 %v151
    %v400 = vunpack.c.l.b16 %v152
    %v401 = vunpack.c.h.b16 %v152
    %v402 = vunpack.c.l.b16 %v153
    %v403 = vunpack.c.h.b16 %v153
    %v404 = vunpack.c.l.b16 %v154
    %v405 = vunpack.c.h.b16 %v154
    %v406 = vunpack.c.l.b16 %v155
    %v407 = vunpack.c.h.b16 %v155
    %v408 = vunpack.c.l.b16 %v156
    %v409 = vunpack.c.h.b16 %v156
    %v410 = vunpack.c.l.b16 %v157
    %v411 = vunpack.c.h.b16 %v157
    %v412 = vunpack.c.l.b16 %v158
    %v413 = vunpack.c.h.b16 %v158
    %v414 = vunpack.c.l.b16 %v159
    %v415 = vunpack.c.h.b16 %v159
    %v416 = vunpack.c.l.b16 %v160
    %v417 = vunpack.c.h.b16 %v160
    %v418 = vunpack.c.l.b16 %v161
    %v419 = vunpack.c.h.b16 %v161
    %v420 = vunpack.c.l.b16 %v162
    %v421 = vunpack.c.h.b16 %v162
    %v422 = vunpack.c.l.b16 %v163
    %v423 = vunpack.c.h.b16 %v163
    %v424 = vunpack.c.l.b16 %v164
    %v425 = vunpack.c.h.b16 %v164
    %v426 = vunpack.c.l.b16 %v165
    %v427 = vunpack.c.h.b16 %v165
    %v428 = vunpack.c.l.b16 %v166
    %v429 = vunpack.c.h.b16 %v166
    %v430 = vunpack.c.l.b16 %v167
    %v431 = vunpack.c.h.b16 %v167
    %v432 = vunpack.c.l.b16 %v168
    %v433 = vunpack.c.h.b16 %v168
    %v434 = vunpack.c.l.b16 %v169
    %v435 = vunpack.c.h.b16 %v169
    %v436 = vunpack.c.l.b16 %v170
    %v437 = vunpack.c.h.b16 %v170
    %v438 = vunpack.c.l.b16 %v171
    %v439 = vunpack.c.h.b16 %v171
    %v440 = vunpack.c.l.b16 %v172
    %v441 = vunpack.c.h.b16 %v172
    %v442 = vunpack.c.l.b16 %v173
    %v443 = vunpack.c.h.b16 %v173
    %v444 = vunpack.c.l.b16 %v174
    %v445 = vunpack.c.h.b16 %v174
    %v446 = vunpack.c.l.b16 %v175
    %v447 = vunpack.c.h.b16 %v175
    %v448 = vunpack.c.l.b16 %v176
    %v449 = vunpack.c.h.b16 %v176
    %v450 = vunpack.c.l.b16 %v177
    %v451 = vunpack.c.h.b16 %v177
    %v452 = vunpack.c.l.b16 %v178
    %v453 = vunpack.c.h.b16 %v178
    %v454 = vunpack.c.l.b16 %v179
    %v455 = vunpack.c.h.b16 %v179
    %v456 = vunpack.c.l.b16 %v180
    %v457 = vunpack.c.h.b16 %v180
    %v458 = vunpack.c.l.b16 %v181
    %v459 = vunpack.c.h.b16 %v181
    %v460 = vunpack.c.l.b16 %v182
    %v461 = vunpack.c.h.b16 %v182
    %v462 = vunpack.c.l.b16 %v183
    %v463 = vunpack.c.h.b16 %v183
    %v464 = vunpack.c.l.b16 %v184
    %v465 = vunpack.c.h.b16 %v184
    %v466 = vunpack.c.l.b16 %v185
    %v467 = vunpack.c.h.b16 %v185
    %v468 = vunpack.c.l.b16 %v186
    %v469 = vunpack.c.h.b16 %v186
    %v470 = vunpack.c.l.b16 %v187
    %v471 = vunpack.c.h.b16 %v187
    %v472 = vunpack.c.l.b16 %v188
    %v473 = vunpack.c.h.b16 %v188
    %v474 = vunpack.c.l.b16 %v189
    %v475 = vunpack.c.h.b16 %v189
    %v476 = vunpack.c.l.b16 %v190
    %v477 = vunpack.c.h.b16 %v190
    %v478 = vunpack.c.l.b16 %v191
    %v479 = vunpack.c.h.b16 %v191
    %v480 = vunpack.c.l.b16 %v192
    %v481 = vunpack.c.h.b16 %v192
    %v482 = vunpack.c.l.b16 %v193
    %v483 = vunpack.c.h.b16 %v193
    %v484 = vunpack.c.l.b16 %v194
    %v485 = vunpack.c.h.b16 %v194
    %v486 = vunpack.c.l.b16 %v195
    %v487 = vunpack.c.h.b16 %v195
    %v488 = vunpack.c.l.b16 %v196
    %v489 = vunpack.c.h.b16 %v196
    %v490 = vunpack.c.l.b16 %v197
    %v491 = vunpack.c.h.b16 %v197
    %v492 = vunpack.c.l.b16 %v198
    %v493 = vunpack.c.h.b16 %v198
    %v494 = vunpack.c.l.b16 %v199
    %v495 = vunpack.c.h.b16 %v199
    %v496 = vunpack.c.l.b16 %v200
    %v497 = vunpack.c.h.b16 %v200
    %v498 = vunpack.c.l.b16 %v201
    %v499 = vunpack.c.h.b16 %v201
    %v500 = vunpack.c.l.b16 %v202
    %v501 = vunpack.c.h.b16 %v202
    %v502 = vunpack.c.l.b16 %v203
    %v503 = vunpack.c.h.b16 %v203
    %v504 = vunpack.c.l.b16 %v204
    %v505 = vunpack.c.h.b16 %v204
    %v506 = vunpack.c.l.b16 %v205
    %v507 = vunpack.c.h.b16 %v205
    %v508 = vunpack.c.l.b16 %v206
    %v509 = vunpack.c.h.b16 %v206
    %v510 = vunpack.c.l.b16 %v207
    %v511 = vunpack.c.h.b16 %v207
    %v512 = vunpack.c.l.b16 %v208
    %v513 = vunpack.c.h.b16 %v208
    %v514 = vunpack.c.l.b16 %v209
    %v515 = vunpack.c.h.b16 %v209
    %v516 = vpack.c.b16 %v322, %v320
    %v517 = vpack.c.b16 %v323, %v321
    %v518 = vpack.c.b16 %v326, %v324
    %v519 = vpack.c.b16 %v327, %v325
    %v520 = vpack.c.b16 %v330, %v328
    %v521 = vpack.c.b16 %v331, %v329
    %v522 = vpack.c.b16 %v334, %v332
    %v523 = vpack.c.b16 %v335, %v333
    %v524 = vpack.c.b16 %v338, %v336
    %v525 = vpack.c.b16 %v339, %v337
    %v526 = vpack.c.b16 %v342, %v340
    %v527 = vpack.c.b16 %v343, %v341
    %v528 = vpack.c.b16 %v346, %v344
    %v529 = vpack.c.b16 %v347, %v345
    %v530 = vpack.c.b16 %v350, %v348
    %v531 = vpack.c.b16 %v351, %v349
    %v532 = vpack.c.b16 %v354, %v352
    %v533 = vpack.c.b16 %v355, %v353
    %v534 = vpack.c.b16 %v358, %v356
    %v535 = vpack.c.b16 %v359, %v357
    %v536 = vpack.c.b16 %v362, %v360
    %v537 = vpack.c.b16 %v363, %v361
    %v538 = vpack.c.b16 %v366, %v364
    %v539 = vpack.c.b16 %v367, %v365
    %v540 = vpack.c.b16 %v370, %v368
    %v541 = vpack.c.b16 %v371, %v369
    %v542 = vpack.c.b16 %v374, %v372
    %v543 = vpack.c.b16 %v375, %v373
    %v544 = vpack.c.b16 %v378, %v376
    %v545 = vpack.c.b16 %v379, %v377
    %v546 = vpack.c.b16 %v382, %v380
    %v547 = vpack.c.b16 %v383, %v381
    %v548 = vpack.c.b16 %v386, %v384
    %v549 = vpack.c.b16 %v387, %v385
    %v550 = vpack.c.b16 %v390, %v388
    %v551 = vpack.c.b16 %v391, %v389
    %v552 = vpack.c.b16 %v394, %v392
    %v553 = vpack.c.b16 %v395, %v393
    %v554 = vpack.c.b16 %v398, %v396
    %v555 = vpack.c.b16 %v399, %v397
    %v556 = vpack.c.b16 %v402, %v400
    %v557 = vpack.c.b16 %v403, %v401
    %v558 = vpack.c.b16 %v406, %v404
    %v559 = vpack.c.b16 %v407, %v405
    %v560 = vpack.c.b16 %v410, %v408
    %v561 = vpack.c.b16 %v411, %v409
    %v562 = vpack.c.b16 %v414, %v412
    %v563 = vpack.c.b16 %v415, %v413
    %v564 = vpack.c.b16 %v418, %v416
    %v565 = vpack.c.b16 %v419, %v417
    %v566 = vpack.c.b16 %v422, %v420
    %v567 = vpack.c.b16 %v423, %v421
    %v568 = vpack.c.b16 %v426, %v424
    %v569 = vpack.c.b16 %v427, %v425
    %v570 = vpack.c.b16 %v430, %v428
    %v571 = vpack.c.b16 %v431, %v429
    %v572 = vpack.c.b16 %v434, %v432
    %v573 = vpack.c.b16 %v435, %v433
    %v574 = vpack.c.b16 %v438, %v436
    %v575 = vpack.c.b16 %v439, %v437
    %v576 = vpack.c.b16 %v442, %v440
    %v577 = vpack.c.b16 %v443, %v441
    %v578 = vpack.c.b16 %v446, %v444
    %v579 = vpack.c.b16 %v447, %v445
    %v580 = vpack.c.b16 %v450, %v448
    %v581 = vpack.c.b16 %v451, %v449
    %v582 = vpack.c.b16 %v454, %v452
    %v583 = vpack.c.b16 %v455, %v453
    %v584 = vpack.c.b16 %v458, %v456
    %v585 = vpack.c.b16 %v459, %v457
    %v586 = vpack.c.b16 %v462, %v460
    %v587 = vpack.c.b16 %v463, %v461
    %v588 = vpack.c.b16 %v466, %v464
    %v589 = vpack.c.b16 %v467, %v465
    %v590 = vpack.c.b16 %v470, %v468
    %v591 = vpack.c.b16 %v471, %v469
    %v592 = vpack.c.b16 %v474, %v472
    %v593 = vpack.c.b16 %v475, %v473
    %v594 = vpack.c.b16 %v478, %v476
    %v595 = vpack.c.b16 %v479, %v477
    %v596 = vpack.c.b16 %v482, %v480
    %v597 = vpack.c.b16 %v483, %v481
    %v598 = vpack.c.b16 %v486, %v484
    %v599 = vpack.c.b16 %v487, %v485
    %v600 = vpack.c.b16 %v490, %v488
    %v601 = vpack.c.b16 %v491, %v489
    %v602 = vpack.c.b16 %v494, %v492
    %v603 = vpack.c.b16 %v495, %v493
    %v604 = vpack.c.b16 %v498, %v496
    %v605 = vpack.c.b16 %v499, %v497
    %v606 = vpack.c.b16 %v502, %v500
    %v607 = vpack.c.b16 %v503, %v501
    %v608 = vpack.c.b16 %v506, %v504
    %v609 = vpack.c.b16 %v507, %v505
    %v610 = vpack.c.b16 %v510, %v508
    %v611 = vpack.c.b16 %v511, %v509
    %v612 = vpack.c.b16 %v514, %v512
    %v613 = vpack.c.b16 %v515, %v513
    %vm712 = vcmask 130048
    %v714 = vsel %vm712, %v111, 0
    %716 = vmatprep.subr.bf16.mxu0 %v517
    %717 = vmatpush1.bf16.msra.mxu0 %v516
    %718 = vmatprep.subr.bf16.mxu0 %v519
    %719 = vmatpush1.bf16.msra.mxu0 %v518
    %720 = vmatprep.subr.bf16.mxu0 %v521
    %721 = vmatpush1.bf16.msra.mxu0 %v520
    %722 = vmatprep.subr.bf16.mxu0 %v523
    %723 = vmatpush1.bf16.msra.mxu0 %v522
    %724 = vmatprep.subr.bf16.mxu0 %v525
    %725 = vmatpush1.bf16.msra.mxu0 %v524
    %726 = vmatprep.subr.bf16.mxu0 %v527
    %727 = vmatpush1.bf16.msra.mxu0 %v526
    %728 = vmatprep.subr.bf16.mxu0 %v529
    %729 = vmatpush1.bf16.msra.mxu0 %v528
    %730 = vmatprep.subr.bf16.mxu0 %v531
    %731 = vmatpush1.bf16.msra.mxu0 %v530
    %732 = vmatprep.subr.bf16.mxu0 %v533
    %733 = vmatpush1.bf16.msra.mxu0 %v532
    %734 = vmatprep.subr.bf16.mxu0 %v535
    %735 = vmatpush1.bf16.msra.mxu0 %v534
    %736 = vmatprep.subr.bf16.mxu0 %v537
    %737 = vmatpush1.bf16.msra.mxu0 %v536
    %738 = vmatprep.subr.bf16.mxu0 %v539
    %739 = vmatpush1.bf16.msra.mxu0 %v538
    %740 = vmatprep.subr.bf16.mxu0 %v541
    %741 = vmatpush1.bf16.msra.mxu0 %v540
    %742 = vmatprep.subr.bf16.mxu0 %v543
    %743 = vmatpush1.bf16.msra.mxu0 %v542
    %744 = vmatprep.subr.bf16.mxu0 %v545
    %745 = vmatpush1.bf16.msra.mxu0 %v544
    %746 = vmatprep.subr.bf16.mxu0 %v547
    %747 = vmatpush1.bf16.msra.mxu0 %v546
    %748 = vmatprep.mubr.bf16.mxu0 %v106
    %749 = vmatmul.mubr.bf16.gmra.mrb[0].mxu0 %v105
    %v750 = vpop.f32.mrb[0].mxu0
    %v751 = vadd.f32 %v215, %v750
    %v752 = vpop.f32.mrb[0].mxu0
    %v753 = vadd.f32 %v219, %v752
    %v754 = vpop.f32.mrb[0].mxu0
    %v755 = vpop.f32.mrb[0].mxu0
    %756 = vdwg.mxu0
    %757 = vmatprep.subr.bf16.mxu0 %v549
    %758 = vmatpush1.bf16.msra.mxu0 %v548
    %759 = vmatprep.subr.bf16.mxu0 %v551
    %760 = vmatpush1.bf16.msra.mxu0 %v550
    %761 = vmatprep.subr.bf16.mxu0 %v553
    %762 = vmatpush1.bf16.msra.mxu0 %v552
    %763 = vmatprep.subr.bf16.mxu0 %v555
    %764 = vmatpush1.bf16.msra.mxu0 %v554
    %765 = vmatprep.subr.bf16.mxu0 %v557
    %766 = vmatpush1.bf16.msra.mxu0 %v556
    %767 = vmatprep.subr.bf16.mxu0 %v559
    %768 = vmatpush1.bf16.msra.mxu0 %v558
    %769 = vmatprep.subr.bf16.mxu0 %v561
    %770 = vmatpush1.bf16.msra.mxu0 %v560
    %771 = vmatprep.subr.bf16.mxu0 %v563
    %772 = vmatpush1.bf16.msra.mxu0 %v562
    %773 = vmatprep.subr.bf16.mxu0 %v565
    %774 = vmatpush1.bf16.msra.mxu0 %v564
    %775 = vmatprep.subr.bf16.mxu0 %v567
    %776 = vmatpush1.bf16.msra.mxu0 %v566
    %777 = vmatprep.subr.bf16.mxu0 %v569
    %778 = vmatpush1.bf16.msra.mxu0 %v568
    %779 = vmatprep.subr.bf16.mxu0 %v571
    %780 = vmatpush1.bf16.msra.mxu0 %v570
    %781 = vmatprep.subr.bf16.mxu0 %v573
    %782 = vmatpush1.bf16.msra.mxu0 %v572
    %783 = vmatprep.subr.bf16.mxu0 %v575
    %784 = vmatpush1.bf16.msra.mxu0 %v574
    %785 = vmatprep.subr.bf16.mxu0 %v577
    %786 = vmatpush1.bf16.msra.mxu0 %v576
    %787 = vmatprep.subr.bf16.mxu0 %v579
    %788 = vmatpush1.bf16.msra.mxu0 %v578
    %789 = vmatprep.mubr.bf16.mxu0 %v108
    %790 = vmatmul.mubr.bf16.gmra.mrb[0].mxu0 %v107
    %v791 = vpop.f32.mrb[0].mxu0
    %v792 = vadd.f32 %v751, %v791
    %v793 = vpop.f32.mrb[0].mxu0
    %v794 = vadd.f32 %v753, %v793
    %v795 = vpop.f32.mrb[0].mxu0
    %v796 = vpop.f32.mrb[0].mxu0
    %797 = vdwg.mxu0
    %798 = vmatprep.subr.bf16.mxu0 %v581
    %799 = vmatpush1.bf16.msra.mxu0 %v580
    %800 = vmatprep.subr.bf16.mxu0 %v583
    %801 = vmatpush1.bf16.msra.mxu0 %v582
    %802 = vmatprep.subr.bf16.mxu0 %v585
    %803 = vmatpush1.bf16.msra.mxu0 %v584
    %804 = vmatprep.subr.bf16.mxu0 %v587
    %805 = vmatpush1.bf16.msra.mxu0 %v586
    %806 = vmatprep.subr.bf16.mxu0 %v589
    %807 = vmatpush1.bf16.msra.mxu0 %v588
    %808 = vmatprep.subr.bf16.mxu0 %v591
    %809 = vmatpush1.bf16.msra.mxu0 %v590
    %810 = vmatprep.subr.bf16.mxu0 %v593
    %811 = vmatpush1.bf16.msra.mxu0 %v592
    %812 = vmatprep.subr.bf16.mxu0 %v595
    %813 = vmatpush1.bf16.msra.mxu0 %v594
    %814 = vmatprep.subr.bf16.mxu0 %v597
    %815 = vmatpush1.bf16.msra.mxu0 %v596
    %816 = vmatprep.subr.bf16.mxu0 %v599
    %817 = vmatpush1.bf16.msra.mxu0 %v598
    %818 = vmatprep.subr.bf16.mxu0 %v601
    %819 = vmatpush1.bf16.msra.mxu0 %v600
    %820 = vmatprep.subr.bf16.mxu0 %v603
    %821 = vmatpush1.bf16.msra.mxu0 %v602
    %822 = vmatprep.subr.bf16.mxu0 %v605
    %823 = vmatpush1.bf16.msra.mxu0 %v604
    %824 = vmatprep.subr.bf16.mxu0 %v607
    %825 = vmatpush1.bf16.msra.mxu0 %v606
    %826 = vmatprep.subr.bf16.mxu0 %v609
    %827 = vmatpush1.bf16.msra.mxu0 %v608
    %828 = vmatprep.subr.bf16.mxu0 %v611
    %829 = vmatpush1.bf16.msra.mxu0 %v610
    %830 = vmatprep.mubr.bf16.mxu0 %v110
    %831 = vmatmul.mubr.bf16.gmra.mrb[0].mxu0 %v109
    %v832 = vpop.f32.mrb[0].mxu0
    %v833 = vadd.f32 %v792, %v832
    %v834 = vpop.f32.mrb[0].mxu0
    %v835 = vadd.f32 %v794, %v834
    %v836 = vpop.f32.mrb[0].mxu0
    %v837 = vpop.f32.mrb[0].mxu0
    %838 = vdwg.mxu0
    %839 = vmatprep.subr.bf16.mxu0 %v613
    %840 = vmatpush1.bf16.msra.mxu0 %v612
    %841 = vmatprep.subr.bf16.mxu0 0
    %842 = vmatpush1.bf16.msra.mxu0 0
    %843 = vmatprep.subr.bf16.mxu0 0
    %844 = vmatpush1.bf16.msra.mxu0 0
    %845 = vmatprep.subr.bf16.mxu0 0
    %846 = vmatpush1.bf16.msra.mxu0 0
    %847 = vmatprep.subr.bf16.mxu0 0
    %848 = vmatpush1.bf16.msra.mxu0 0
    %849 = vmatprep.subr.bf16.mxu0 0
    %850 = vmatpush1.bf16.msra.mxu0 0
    %851 = vmatprep.subr.bf16.mxu0 0
    %852 = vmatpush1.bf16.msra.mxu0 0
    %853 = vmatprep.subr.bf16.mxu0 0
    %854 = vmatpush1.bf16.msra.mxu0 0
    %855 = vmatprep.subr.bf16.mxu0 0
    %856 = vmatpush1.bf16.msra.mxu0 0
    %857 = vmatprep.subr.bf16.mxu0 0
    %858 = vmatpush1.bf16.msra.mxu0 0
    %859 = vmatprep.subr.bf16.mxu0 0
    %860 = vmatpush1.bf16.msra.mxu0 0
    %861 = vmatprep.subr.bf16.mxu0 0
    %862 = vmatpush1.bf16.msra.mxu0 0
    %863 = vmatprep.subr.bf16.mxu0 0
    %864 = vmatpush1.bf16.msra.mxu0 0
    %865 = vmatprep.subr.bf16.mxu0 0
    %866 = vmatpush1.bf16.msra.mxu0 0
    %867 = vmatprep.subr.bf16.mxu0 0
    %868 = vmatpush1.bf16.msra.mxu0 0
    %869 = vmatprep.subr.bf16.mxu0 0
    %870 = vmatpush1.bf16.msra.mxu0 0
    %871 = vmatprep.mubr.bf16.mxu0 0
    %872 = vmatmul.mubr.bf16.gmra.mrb[0].mxu0 %v714
    %v873 = vpop.f32.mrb[0].mxu0
    %v874 = vadd.f32 %v833, %v873
    %v875 = vpop.f32.mrb[0].mxu0
    %v876 = vadd.f32 %v835, %v875
    %v877 = vpop.f32.mrb[0].mxu0
    %v878 = vpop.f32.mrb[0].mxu0
    %879 = vdwg.mxu0
    %v880 = vmax.f32 %v874, 0.0
    %v881 = vmax.f32 %v876, 0.0
    %v882 = vld [vmem:[#allocation7] sm:$0xff]
    %v883 = vld [vmem:[#allocation7 + $0x8] sm:$0xff]
    %v884 = vld [vmem:[#allocation7 + $0x10] sm:$0xff]
    %v885 = vld [vmem:[#allocation7 + $0x18] sm:$0xff]
    %v886 = vld [vmem:[#allocation7 + $0x20] sm:$0xff]
    %v887 = vld [vmem:[#allocation7 + $0x28] sm:$0xff]
    %v888 = vld [vmem:[#allocation7 + $0x30] sm:$0xff]
    %v889 = vld [vmem:[#allocation7 + $0x38] sm:$0xff]
    %v890 = vld [vmem:[#allocation7 + $0x40] sm:$0xff]
    %v891 = vld [vmem:[#allocation7 + $0x48] sm:$0xff]
    %v892 = vld [vmem:[#allocation7 + $0x50] sm:$0xff]
    %v893 = vld [vmem:[#allocation7 + $0x58] sm:$0xff]
    %v894 = vld [vmem:[#allocation7 + $0x60] sm:$0xff]
    %v895 = vld [vmem:[#allocation7 + $0x68] sm:$0xff]
    %v896 = vld [vmem:[#allocation7 + $0x70] sm:$0xff]
    %v897 = vld [vmem:[#allocation7 + $0x78] sm:$0xff]
    %v898 = vld [vmem:[#allocation7 + $0x80] sm:$0xff]
    %v899 = vld [vmem:[#allocation7 + $0x88] sm:$0xff]
    %v900 = vld [vmem:[#allocation7 + $0x90] sm:$0xff]
    %v901 = vld [vmem:[#allocation7 + $0x98] sm:$0xff]
    %v902 = vld [vmem:[#allocation7 + $0xa0] sm:$0xff]
    %v903 = vld [vmem:[#allocation7 + $0xa8] sm:$0xff]
    %v904 = vld [vmem:[#allocation7 + $0xb0] sm:$0xff]
    %v905 = vld [vmem:[#allocation7 + $0xb8] sm:$0xff]
    %v906 = vld [vmem:[#allocation7 + $0xc0] sm:$0xff]
    %v907 = vld [vmem:[#allocation7 + $0xc8] sm:$0xff]
    %v908 = vld [vmem:[#allocation7 + $0xd0] sm:$0xff]
    %v909 = vld [vmem:[#allocation7 + $0xd8] sm:$0xff]
    %v910 = vld [vmem:[#allocation7 + $0xe0] sm:$0xff]
    %v911 = vld [vmem:[#allocation7 + $0xe8] sm:$0xff]
    %v912 = vld [vmem:[#allocation7 + $0xf0] sm:$0xff]
    %v913 = vld [vmem:[#allocation7 + $0xf8] sm:$0xff]
    %v914 = vld [vmem:[%s4] sm:$0x1]
    %v916 = vlaneseq
    %v917 = vshrl.u32 %v916, 7
    %v918 = vsub.s32 0, %v917
    %v919 = vrot.slane %v914, %v918
    %921 = vmatprep.subr.mxu0 0.0
    %922 = vmatpush1.msra.mxu0 %v882
    %923 = vmatprep.subr.mxu0 0.0
    %924 = vmatpush1.msra.mxu0 %v883
    %925 = vmatprep.subr.mxu0 0.0
    %926 = vmatpush1.msra.mxu0 %v884
    %927 = vmatprep.subr.mxu0 0.0
    %928 = vmatpush1.msra.mxu0 %v885
    %929 = vmatprep.subr.mxu0 0.0
    %930 = vmatpush1.msra.mxu0 %v886
    %931 = vmatprep.subr.mxu0 0.0
    %932 = vmatpush1.msra.mxu0 %v887
    %933 = vmatprep.subr.mxu0 0.0
    %934 = vmatpush1.msra.mxu0 %v888
    %935 = vmatprep.subr.mxu0 0.0
    %936 = vmatpush1.msra.mxu0 %v889
    %937 = vmatprep.subr.mxu0 0.0
    %938 = vmatpush1.msra.mxu0 %v890
    %939 = vmatprep.subr.mxu0 0.0
    %940 = vmatpush1.msra.mxu0 %v891
    %941 = vmatprep.subr.mxu0 0.0
    %942 = vmatpush1.msra.mxu0 %v892
    %943 = vmatprep.subr.mxu0 0.0
    %944 = vmatpush1.msra.mxu0 %v893
    %945 = vmatprep.subr.mxu0 0.0
    %946 = vmatpush1.msra.mxu0 %v894
    %947 = vmatprep.subr.mxu0 0.0
    %948 = vmatpush1.msra.mxu0 %v895
    %949 = vmatprep.subr.mxu0 0.0
    %950 = vmatpush1.msra.mxu0 %v896
    %951 = vmatprep.subr.mxu0 0.0
    %952 = vmatpush1.msra.mxu0 %v897
    %953 = vmatprep.subr.mxu0 0.0
    %954 = vmatpush1.msra.mxu0 %v898
    %955 = vmatprep.subr.mxu0 0.0
    %956 = vmatpush1.msra.mxu0 %v899
    %957 = vmatprep.subr.mxu0 0.0
    %958 = vmatpush1.msra.mxu0 %v900
    %959 = vmatprep.subr.mxu0 0.0
    %960 = vmatpush1.msra.mxu0 %v901
    %961 = vmatprep.subr.mxu0 0.0
    %962 = vmatpush1.msra.mxu0 %v902
    %963 = vmatprep.subr.mxu0 0.0
    %964 = vmatpush1.msra.mxu0 %v903
    %965 = vmatprep.subr.mxu0 0.0
    %966 = vmatpush1.msra.mxu0 %v904
    %967 = vmatprep.subr.mxu0 0.0
    %968 = vmatpush1.msra.mxu0 %v905
    %969 = vmatprep.subr.mxu0 0.0
    %970 = vmatpush1.msra.mxu0 %v906
    %971 = vmatprep.subr.mxu0 0.0
    %972 = vmatpush1.msra.mxu0 %v907
    %973 = vmatprep.subr.mxu0 0.0
    %974 = vmatpush1.msra.mxu0 %v908
    %975 = vmatprep.subr.mxu0 0.0
    %976 = vmatpush1.msra.mxu0 %v909
    %977 = vmatprep.subr.mxu0 0.0
    %978 = vmatpush1.msra.mxu0 %v910
    %979 = vmatprep.subr.mxu0 0.0
    %980 = vmatpush1.msra.mxu0 %v911
    %981 = vmatprep.subr.mxu0 0.0
    %982 = vmatpush1.msra.mxu0 %v912
    %983 = vmatprep.subr.mxu0 0.0
    %984 = vmatpush1.msra.mxu0 %v913
    %985 = vmatprep.mubr.f32.mxu0 %v881
    %986 = vmatmul.mubr.f32.gmra.mrb[0].mxu0 %v880
    %v987 = vpop.f32.mrb[0].mxu0
    %v988 = vadd.f32 %v919, %v987
    %v989 = vpop.f32.mrb[0].mxu0
    %990 = vdwg.mxu0
    %991 = vst [vmem:[#allocation8] sm:$0x3] %v988
    // Predicated region
    $region34: #{tpu_custom_call.1} parent=1 // pred_check
      _
    $region35: #{tpu_custom_call.1} parent=1 // pred_check_branch
      %993 = sbr.rel (0) target = $region37
    $region36: #{tpu_custom_call.1} parent=1 // pred_region
      %s995 = ssub.s32 32, 32
      %996 = vsyncadd [#allocation4], %s995
      %s998 = sshll.u32 [#allocation8], 4
      %s999 = int_to_ptr.vmem [resolvable:$true] %s998
      %1001 = dma.vmem_to_hbm [thread:$0]  %s999, 32, %s5, [#allocation4]
    $region37: #{tpu_custom_call.1} parent=1 // pred_fallthru
      _
    // Predicated region
    $region38: #{tpu_custom_call.1} parent=1 // pred_check
      _
    $region39: #{tpu_custom_call.1} parent=1 // pred_check_branch
      %1003 = sbr.rel (0) target = $region41
    $region40: #{tpu_custom_call.1} parent=1 // pred_region
      %1004 = dma.done [#allocation4], 32
    $region41: #{tpu_custom_call.1} parent=1 // pred_fallthru
      _
    %1005 = vsyncpa [#allocation3], 1
    %1006 = vsyncpa [#allocation6], 1
    %1007 = vsyncpa [#allocation4], 1

</llo_original>
